<compile_context>
chip_gen: v7x
topology: tpu7x:2x2x1
jax: 0.10.0
libtpu: 0.0.40
codegen_flags: <defaults>
</compile_context>

<pallas_src>
import jax
import jax.numpy as jnp
from jax import lax
from jax.experimental import pallas as pl
from jax.experimental.pallas import tpu as pltpu

EPS = 1e-3


def conv_bn_relu_kernel(x_ref, w_ref, gamma_ref, beta_ref, o_ref):
    # x_ref:     (M, K)        im2col patches, M = N*H*W, K = KW*C_in
    # w_ref:     (K, CB)       one 128-wide slab of output channels
    # gamma_ref: (1, CB)
    # beta_ref:  (1, CB)
    # o_ref:     (M, CB)
    acc = jnp.dot(x_ref[...], w_ref[...],
                  preferred_element_type=jnp.float32)        # (M, CB)

    m = acc.shape[0]
    inv_m = 1.0 / m
    # Single-pass per-channel batch statistics (biased variance, train mode).
    s = jnp.sum(acc, axis=0, keepdims=True)
    sq = jnp.sum(acc * acc, axis=0, keepdims=True)
    mean = s * inv_m
    var = sq * inv_m - mean * mean
    inv_std = lax.rsqrt(var + EPS)

    y = (acc - mean) * (inv_std * gamma_ref[...]) + beta_ref[...]
    o_ref[...] = jnp.maximum(y, 0.0)


def conv_bn_relu(x_nchw, w_oihw, gamma, beta, *, c_block=128):
    N, C_in, H, W = x_nchw.shape
    C_out, _, KH, KW = w_oihw.shape
    assert KH == 1 and KW == 3
    assert C_out % c_block == 0

    # NCHW -> channels-last rows, pad W by 1 each side (padding=(0,1)),
    # then im2col: row (n*H*W + h*W + w) = concat_kw x_pad[nh, w+kw, :].
    x_rows = jnp.transpose(x_nchw, (0, 2, 3, 1)).reshape(N * H, W, C_in)
    x_pad = jnp.pad(x_rows, ((0, 0), (1, 1), (0, 0)))
    taps = [x_pad[:, kw:kw + W, :] for kw in range(KW)]        # each (NH, W, C_in)
    x_im2col = jnp.concatenate(taps, axis=-1).reshape(N * H * W, KW * C_in)

    # (C_out, C_in, 1, KW) -> (KW*C_in, C_out); row index = kw*C_in + c_in,
    # matching the im2col column ordering above.
    w2d = jnp.transpose(w_oihw[:, :, 0, :], (2, 1, 0)).reshape(KW * C_in, C_out)

    gamma2 = gamma.reshape(1, C_out)
    beta2 = beta.reshape(1, C_out)

    M = N * H * W
    K = KW * C_in
    grid = (C_out // c_block,)

    out2d = pl.pallas_call(
        conv_bn_relu_kernel,
        out_shape=jax.ShapeDtypeStruct((M, C_out), jnp.float32),
        grid=grid,
        in_specs=[
            # x: same block every step -> stays resident in VMEM, no re-DMA.
            pl.BlockSpec((M, K), lambda i: (0, 0)),
            # weights: the dominant HBM traffic; tiled over C_out so the DMA
            # for block i+1 overlaps compute on block i (default double-buffer).
            pl.BlockSpec((K, c_block), lambda i: (0, i)),
            pl.BlockSpec((1, c_block), lambda i: (0, i)),
            pl.BlockSpec((1, c_block), lambda i: (0, i)),
        ],
        out_specs=pl.BlockSpec((M, c_block), lambda i: (0, i)),
        compiler_params=pltpu.CompilerParams(
            dimension_semantics=("parallel",)),
    )(x_im2col, w2d, gamma2, beta2)

    # (N*H*W, C_out) -> NCHW. TODO(synk): if the surrounding graph can stay
    # NHWC, drop this transpose and keep the lane-dense layout end-to-end.
    out = out2d.reshape(N, H, W, C_out)
    return jnp.transpose(out, (0, 3, 1, 2))


def reference(x_nchw, w_oihw, gamma, beta):
    conv = lax.conv_general_dilated(
        x_nchw, w_oihw, window_strides=(1, 1),
        padding=((0, 0), (1, 1)),
        dimension_numbers=("NCHW", "OIHW", "NCHW"))
    mean = jnp.mean(conv, axis=(0, 2, 3), keepdims=True)
    var = jnp.mean((conv - mean) ** 2, axis=(0, 2, 3), keepdims=True)
    y = (conv - mean) * lax.rsqrt(var + EPS)
    y = y * gamma.reshape(1, -1, 1, 1) + beta.reshape(1, -1, 1, 1)
    return jnp.maximum(y, 0.0)


if __name__ == "__main__":
    key = jax.random.PRNGKey(0)
    kx, kw = jax.random.split(key)

    N, C, H, W = 1, 384, 5, 5
    x = jax.random.normal(kx, (N, C, H, W), dtype=jnp.float32)
    # Conv2d weight (C_out, C_in, 1, 3), deterministic init; no bias.
    w = jax.random.normal(kw, (C, C, 1, 3), dtype=jnp.float32) * 0.02
    # BatchNorm2d default affine init: gamma = 1, beta = 0.
    gamma = jnp.ones((C,), dtype=jnp.float32)
    beta = jnp.zeros((C,), dtype=jnp.float32)

    out = conv_bn_relu(x, w, gamma, beta)
    out = jax.block_until_ready(out)

    ref = jax.block_until_ready(reference(x, w, gamma, beta))
    assert out.shape == (N, C, H, W)
    assert jnp.allclose(out, ref, atol=1e-4, rtol=1e-4), float(
        jnp.max(jnp.abs(out - ref)))

    print("KERNEL_OK")
</pallas_src>

<mosaic_0001>
module attributes {stable_mosaic.version = 11 : i64} {
  func.func @conv_bn_relu_kernel(%arg0: i32, %arg1: memref<25x1152xf32, #tpu.memory_space<vmem>>, %arg2: memref<1152x128xf32, #tpu.memory_space<vmem>>, %arg3: memref<1x128xf32, #tpu.memory_space<vmem>>, %arg4: memref<1x128xf32, #tpu.memory_space<vmem>>, %arg5: memref<25x128xf32, #tpu.memory_space<vmem>>) attributes {dimension_semantics = [#tpu.dimension_semantics<parallel>], iteration_bounds = array<i64: 3>, scalar_prefetch = 0 : i64, scratch_operands = 0 : i64, tpu.core_type = #tpu.core_type<tc>, window_params = [{pipeline_mode = #tpu.pipeline_mode<synchronous>, transform_indices = @transform_0, window_bounds = array<i64: 25, 1152>}, {transform_indices = @transform_1, window_bounds = array<i64: 1152, 128>}, {transform_indices = @transform_2, window_bounds = array<i64: 1, 128>}, {transform_indices = @transform_3, window_bounds = array<i64: 1, 128>}, {transform_indices = @transform_4, window_bounds = array<i64: 25, 128>}]} {
    %c0 = arith.constant 0 : index
    %c0_0 = arith.constant 0 : index
    %0 = vector.load %arg1[%c0, %c0_0] : memref<25x1152xf32, #tpu.memory_space<vmem>>, vector<25x1152xf32>
    %c0_1 = arith.constant 0 : index
    %c0_2 = arith.constant 0 : index
    %1 = vector.load %arg2[%c0_1, %c0_2] : memref<1152x128xf32, #tpu.memory_space<vmem>>, vector<1152x128xf32>
    %cst = arith.constant dense<0.000000e+00> : vector<25x128xf32>
    %2 = tpu.matmul %0, %1, %cst {dimension_numbers = #tpu.dot_dimension_numbers<[1], [0], [0], [1], [0, 0, 1, 1], [], []>} : vector<25x1152xf32>, vector<1152x128xf32>, vector<25x128xf32> -> vector<25x128xf32>
    %cst_3 = arith.constant dense<0.000000e+00> : vector<128xf32>
    %3 = vector.multi_reduction <add>, %2, %cst_3 [0] : vector<25x128xf32> to vector<128xf32>
    %4 = vector.shape_cast %3 : vector<128xf32> to vector<1x128xf32>
    %5 = arith.mulf %2, %2 : vector<25x128xf32>
    %cst_4 = arith.constant dense<0.000000e+00> : vector<128xf32>
    %6 = vector.multi_reduction <add>, %5, %cst_4 [0] : vector<25x128xf32> to vector<128xf32>
    %7 = vector.shape_cast %6 : vector<128xf32> to vector<1x128xf32>
    %cst_5 = arith.constant 4.000000e-02 : f32
    %8 = vector.broadcast %cst_5 : f32 to vector<1x128xf32>
    %9 = arith.mulf %4, %8 : vector<1x128xf32>
    %cst_6 = arith.constant 4.000000e-02 : f32
    %10 = vector.broadcast %cst_6 : f32 to vector<1x128xf32>
    %11 = arith.mulf %7, %10 : vector<1x128xf32>
    %12 = arith.mulf %9, %9 : vector<1x128xf32>
    %13 = arith.subf %11, %12 : vector<1x128xf32>
    %cst_7 = arith.constant 1.000000e-03 : f32
    %14 = vector.broadcast %cst_7 : f32 to vector<1x128xf32>
    %15 = arith.addf %13, %14 : vector<1x128xf32>
    %16 = math.rsqrt %15 : vector<1x128xf32>
    %17 = vector.broadcast %9 : vector<1x128xf32> to vector<25x128xf32>
    %18 = arith.subf %2, %17 : vector<25x128xf32>
    %c0_8 = arith.constant 0 : index
    %c0_9 = arith.constant 0 : index
    %19 = vector.load %arg3[%c0_8, %c0_9] : memref<1x128xf32, #tpu.memory_space<vmem>>, vector<1x128xf32>
    %20 = arith.mulf %16, %19 : vector<1x128xf32>
    %21 = vector.broadcast %20 : vector<1x128xf32> to vector<25x128xf32>
    %22 = arith.mulf %18, %21 : vector<25x128xf32>
    %c0_10 = arith.constant 0 : index
    %c0_11 = arith.constant 0 : index
    %23 = vector.load %arg4[%c0_10, %c0_11] : memref<1x128xf32, #tpu.memory_space<vmem>>, vector<1x128xf32>
    %24 = vector.broadcast %23 : vector<1x128xf32> to vector<25x128xf32>
    %25 = arith.addf %22, %24 : vector<25x128xf32>
    %cst_12 = arith.constant 0.000000e+00 : f32
    %26 = vector.broadcast %cst_12 : f32 to vector<25x128xf32>
    %27 = arith.maximumf %25, %26 : vector<25x128xf32>
    %c0_13 = arith.constant 0 : index
    %c0_14 = arith.constant 0 : index
    %28 = vector.load %arg5[%c0_13, %c0_14] : memref<25x128xf32, #tpu.memory_space<vmem>>, vector<25x128xf32>
    tpu.vector_store %arg5[%c0_13, %c0_14], %27 {strides = array<i32>} : memref<25x128xf32, #tpu.memory_space<vmem>>, vector<25x128xf32>,
    return
  }
  func.func @transform_0(%arg0: i32) -> (i32, i32) {
    %c0_i32 = arith.constant 0 : i32
    %c0_i32_0 = arith.constant 0 : i32
    %c0_i32_1 = arith.constant 0 : i32
    return %c0_i32, %c0_i32_0 : i32, i32
  }
  func.func @transform_1(%arg0: i32) -> (i32, i32) {
    %c0_i32 = arith.constant 0 : i32
    %c0_i32_0 = arith.constant 0 : i32
    return %c0_i32, %arg0 : i32, i32
  }
  func.func @transform_2(%arg0: i32) -> (i32, i32) {
    %c0_i32 = arith.constant 0 : i32
    %c0_i32_0 = arith.constant 0 : i32
    return %c0_i32, %arg0 : i32, i32
  }
  func.func @transform_3(%arg0: i32) -> (i32, i32) {
    %c0_i32 = arith.constant 0 : i32
    %c0_i32_0 = arith.constant 0 : i32
    return %c0_i32, %arg0 : i32, i32
  }
  func.func @transform_4(%arg0: i32) -> (i32, i32) {
    %c0_i32 = arith.constant 0 : i32
    %c0_i32_0 = arith.constant 0 : i32
    return %c0_i32, %arg0 : i32, i32
  }
}

</mosaic_0001>

<llo_original>
// kernel: tpu_custom_call.1
$region0: #{tpu_custom_call.1}
  #allocation0 [shape = 'u32[]', space=smem, size = 0x4, offset = 0x4, fixed_abs, tag = 'smem constant byte address 0x4 - core index']
  #allocation1 [shape = 'u32[144,128]{1,0:T(1,128)}', space=vmem, size = 0x12000, scoped, tag = 'internal scratch']
  %s0 = inlined_call_operand.hbm [shape: f32[25,1152], index: 0, kind: input, shape index: {}]
  %s1 = inlined_call_operand.hbm [shape: f32[1152,384], index: 1, kind: input, shape index: {}]
  %s2 = inlined_call_operand.hbm [shape: f32[1,384], index: 2, kind: input, shape index: {}]
  %s3 = inlined_call_operand.hbm [shape: f32[1,384], index: 3, kind: input, shape index: {}]
  %s4 = inlined_call_operand.hbm [shape: f32[25,384], index: 4, kind: output, shape index: {}]
  %s5 = sld [smem:[#allocation0]]
  $region65: #{tpu_custom_call.1} parent=0
    _
  %s7 = ssub.s32 1, %s5
  %s8 = scalar_select 0, %s7, %s5
  $region1: #{tpu_custom_call.1} parent=0
    #allocation2 [shape = 'u8[147456]{0}', space=vmem, size = 0x24000, scoped, tag = 'input window, operand 0, single buffered']
    #allocation3 [shape = 's32[2]{0}', space=sflag, size = 0x8, scoped, tag = 'scoped memory for tpu_custom_call.1']
    #allocation4 [shape = 's32[2]{0}', space=sflag, size = 0x8, scoped, tag = 'scoped memory for tpu_custom_call.1']
    #allocation5 [shape = 'u8[1179648]{0}', space=vmem, size = 0x120000, scoped, tag = 'input window, operand 1']
    #allocation6 [shape = 's32[2]{0}', space=sflag, size = 0x8, scoped, tag = 'scoped memory for tpu_custom_call.1']
    #allocation7 [shape = 'u8[1024]{0}', space=vmem, size = 0x400, scoped, tag = 'input window, operand 2']
    #allocation8 [shape = 'u8[1024]{0}', space=vmem, size = 0x400, scoped, tag = 'input window, operand 3']
    #allocation9 [shape = 's32[2]{0}', space=sflag, size = 0x8, scoped, tag = 'scoped memory for tpu_custom_call.1']
    #allocation10 [shape = 'u8[32768]{0}', space=vmem, size = 0x8000, scoped, tag = 'output window, operand 0']
    %9 = vsyncpa [#allocation3], 0
    %10 = vsyncpa [#allocation6], 0
    %s11 = scalar_lea.sflag [#allocation6], 1
    %12 = vsyncpa %s11, 0
    %13 = vsyncpa [#allocation9], 0
    %s14 = scalar_lea.sflag [#allocation9], 1
    %15 = vsyncpa %s14, 0
    %16 = vsyncpa [#allocation4], 0
    %s17 = scalar_lea.sflag [#allocation4], 1
    %18 = vsyncpa %s17, 0
    loop: start=0, step=1, limit=5
    $region2: #{tpu_custom_call.1} parent=1 // loop_pre_header
      _
    $region3: #{tpu_custom_call.1} parent=1 // loop_header
      %s20 = sphi 0, %s24
      %p21 = scmp.ge.s32.totalorder %s20, 5
      %s28 = sphi 0, %s28
      %s30 = sphi 0, %s28
      %s31 = sphi 0, %s30
      %s45 = sphi 0, %s31
      %s51 = sphi 0, %s53
      %s54 = sphi 0, %s51
      %s55 = sphi 0, %s54
      %s71 = sphi 0, %s55
      %s77 = sphi 0, %s79
      %s80 = sphi 0, %s77
      %s81 = sphi 0, %s80
      %s97 = sphi 0, %s81
      %s103 = sphi 0, %s105
      %s106 = sphi 0, %s103
      %s107 = sphi 0, %s106
      %s123 = sphi 0, %s107
      %s129 = sphi 0, %s131
      %s132 = sphi 0, %s129
      %s133 = sphi 0, %s132
      %s149 = sphi 0, %s133
    $region4: #{tpu_custom_call.1} parent=1 // loop_header_branch
      %23 = sbr.rel (%p21) target = $region8
    $region5: #{tpu_custom_call.1} parent=1 // loop_body
      %s25 = ssub.s32 %s20, 1
      %s26 = ssub.s32 %s20, 2
      %s27 = sadd.s32 %s20, 1
      %s29 = sadd.s32 %s28, 1
      %p32 = scmp.eq.s32.totalorder %s20, 2
      %p33 = scmp.ne.s32.totalorder %s28, %s30
      %p34 = scmp.eq.s32.totalorder %s20, 0
      %p35 = por %p33, %p34
      %p36 = scmp.ne.s32.totalorder %s28, %s30
      %p37 = scmp.eq.s32.totalorder %s25, 2
      %p38 = por %p36, %p37
      %p39 = scmp.ne.s32.totalorder %s30, %s31
      %p40 = scmp.eq.s32.totalorder %s25, 0
      %p41 = por %p39, %p40
      %p42 = scmp.ne.s32.totalorder %s30, %s31
      %p43 = scmp.eq.s32.totalorder %s26, 2
      %p44 = por %p42, %p43
      %p46 = scmp.ne.s32.totalorder %s31, %s45
      %p47 = scmp.eq.s32.totalorder %s26, 0
      %p48 = por %p46, %p47
      %s49 = ssub.s32 %s20, %s27
      %p50 = scmp.eq.s32.totalorder %s49, 0
      %s52 = sadd.s32 %s51, 1
      %s53 = scalar_select %p50, %s51, %s52
      %p56 = pneg %p50
      %p57 = scmp.eq.s32.totalorder %s20, 2
      %p58 = por %p56, %p57
      %p59 = scmp.ne.s32.totalorder %s51, %s54
      %p60 = scmp.eq.s32.totalorder %s20, 0
      %p61 = por %p59, %p60
      %p62 = scmp.ne.s32.totalorder %s51, %s54
      %p63 = scmp.eq.s32.totalorder %s25, 2
      %p64 = por %p62, %p63
      %p65 = scmp.ne.s32.totalorder %s54, %s55
      %p66 = scmp.eq.s32.totalorder %s25, 0
      %p67 = por %p65, %p66
      %p68 = scmp.ne.s32.totalorder %s54, %s55
      %p69 = scmp.eq.s32.totalorder %s26, 2
      %p70 = por %p68, %p69
      %p72 = scmp.ne.s32.totalorder %s55, %s71
      %p73 = scmp.eq.s32.totalorder %s26, 0
      %p74 = por %p72, %p73
      %s75 = ssub.s32 %s20, %s27
      %p76 = scmp.eq.s32.totalorder %s75, 0
      %s78 = sadd.s32 %s77, 1
      %s79 = scalar_select %p76, %s77, %s78
      %p82 = pneg %p76
      %p83 = scmp.eq.s32.totalorder %s20, 2
      %p84 = por %p82, %p83
      %p85 = scmp.ne.s32.totalorder %s77, %s80
      %p86 = scmp.eq.s32.totalorder %s20, 0
      %p87 = por %p85, %p86
      %p88 = scmp.ne.s32.totalorder %s77, %s80
      %p89 = scmp.eq.s32.totalorder %s25, 2
      %p90 = por %p88, %p89
      %p91 = scmp.ne.s32.totalorder %s80, %s81
      %p92 = scmp.eq.s32.totalorder %s25, 0
      %p93 = por %p91, %p92
      %p94 = scmp.ne.s32.totalorder %s80, %s81
      %p95 = scmp.eq.s32.totalorder %s26, 2
      %p96 = por %p94, %p95
      %p98 = scmp.ne.s32.totalorder %s81, %s97
      %p99 = scmp.eq.s32.totalorder %s26, 0
      %p100 = por %p98, %p99
      %s101 = ssub.s32 %s20, %s27
      %p102 = scmp.eq.s32.totalorder %s101, 0
      %s104 = sadd.s32 %s103, 1
      %s105 = scalar_select %p102, %s103, %s104
      %p108 = pneg %p102
      %p109 = scmp.eq.s32.totalorder %s20, 2
      %p110 = por %p108, %p109
      %p111 = scmp.ne.s32.totalorder %s103, %s106
      %p112 = scmp.eq.s32.totalorder %s20, 0
      %p113 = por %p111, %p112
      %p114 = scmp.ne.s32.totalorder %s103, %s106
      %p115 = scmp.eq.s32.totalorder %s25, 2
      %p116 = por %p114, %p115
      %p117 = scmp.ne.s32.totalorder %s106, %s107
      %p118 = scmp.eq.s32.totalorder %s25, 0
      %p119 = por %p117, %p118
      %p120 = scmp.ne.s32.totalorder %s106, %s107
      %p121 = scmp.eq.s32.totalorder %s26, 2
      %p122 = por %p120, %p121
      %p124 = scmp.ne.s32.totalorder %s107, %s123
      %p125 = scmp.eq.s32.totalorder %s26, 0
      %p126 = por %p124, %p125
      %s127 = ssub.s32 %s20, %s27
      %p128 = scmp.eq.s32.totalorder %s127, 0
      %s130 = sadd.s32 %s129, 1
      %s131 = scalar_select %p128, %s129, %s130
      %p134 = pneg %p128
      %p135 = scmp.eq.s32.totalorder %s20, 2
      %p136 = por %p134, %p135
      %p137 = scmp.ne.s32.totalorder %s129, %s132
      %p138 = scmp.eq.s32.totalorder %s20, 0
      %p139 = por %p137, %p138
      %p140 = scmp.ne.s32.totalorder %s129, %s132
      %p141 = scmp.eq.s32.totalorder %s25, 2
      %p142 = por %p140, %p141
      %p143 = scmp.ne.s32.totalorder %s132, %s133
      %p144 = scmp.eq.s32.totalorder %s25, 0
      %p145 = por %p143, %p144
      %p146 = scmp.ne.s32.totalorder %s132, %s133
      %p147 = scmp.eq.s32.totalorder %s26, 2
      %p148 = por %p146, %p147
      %p150 = scmp.ne.s32.totalorder %s133, %s149
      %p151 = scmp.eq.s32.totalorder %s26, 0
      %p152 = por %p150, %p151
      %p153 = scmp.le.s32.totalorder 1, %s20
      %p154 = scmp.lt.s32.totalorder %s20, 4
      %p155 = pnand %p153, %p154
      %p156 = pneg %p155
      // Predicated region
      $region9: #{tpu_custom_call.1} parent=5 // pred_check
        _
      $region10: #{tpu_custom_call.1} parent=5 // pred_check_branch
        %158 = sbr.rel (%p155) target = $region12
      $region11: #{tpu_custom_call.1} parent=5 // pred_region
        %s159 = ssub.s32 %s20, 1
        // Predicated region
        $region13: #{tpu_custom_call.1} parent=11 // pred_check
          %p160 = pneg %p41
        $region14: #{tpu_custom_call.1} parent=11 // pred_check_branch
          %162 = sbr.rel (%p160) target = $region16
        $region15: #{tpu_custom_call.1} parent=11 // pred_region
          %s164 = ssub.s32 4608, 4608
          %165 = vsyncadd [#allocation3], %s164
          %s166 = sshll.u32 [#allocation2], 4
          %s167 = int_to_ptr.vmem [resolvable:$true] %s166
          %172 = dma.hbm_to_vmem [thread:$0]  %s0, 4608, %s167, [#allocation3], 1152, 1152, 72
        $region16: #{tpu_custom_call.1} parent=11 // pred_fallthru
          _
      $region12: #{tpu_custom_call.1} parent=5 // pred_fallthru
        _
      %p173 = scmp.lt.s32.totalorder %s20, 3
      // Predicated region
      $region17: #{tpu_custom_call.1} parent=5 // pred_check
        %p174 = pneg %p173
      $region18: #{tpu_custom_call.1} parent=5 // pred_check_branch
        %176 = sbr.rel (%p174) target = $region20
      $region19: #{tpu_custom_call.1} parent=5 // pred_region
        // Predicated region
        $region21: #{tpu_custom_call.1} parent=19 // pred_check
          %p177 = pneg %p61
        $region22: #{tpu_custom_call.1} parent=19 // pred_check_branch
          %179 = sbr.rel (%p177) target = $region24
        $region23: #{tpu_custom_call.1} parent=19 // pred_region
          %s180 = sand.u32 %s20, 1
          %s181 = scalar_lea.sflag [#allocation6], %s180
          %s182 = sand.u32 %s51, 1
          %s183 = smul.addr %s182, 1152
          %s184 = scalar_lea.vmem [#allocation5], %s183
          %s186 = ssub.s32 18432, 18432
          %187 = vsyncadd %s181, %s186
          %s188 = smul.addr %s20, 128
          %s189 = scalar_lea.hbm %s1, %s188
          %s190 = sshll.u32 %s184, 4
          %s191 = int_to_ptr.vmem [resolvable:$true] %s190
          %196 = dma.hbm_to_vmem [thread:$0]  %s189, 18432, %s191, %s181, 384, 128, 8
        $region24: #{tpu_custom_call.1} parent=19 // pred_fallthru
          _
        // Predicated region
        $region25: #{tpu_custom_call.1} parent=19 // pred_check
          %p197 = pneg %p87
        $region26: #{tpu_custom_call.1} parent=19 // pred_check_branch
          %199 = sbr.rel (%p197) target = $region28
        $region27: #{tpu_custom_call.1} parent=19 // pred_region
          %s200 = sand.u32 %s20, 1
          %s201 = scalar_lea.sflag [#allocation6], %s200
          %s202 = sand.u32 %s77, 1
          %s203 = scalar_lea.vmem [#allocation7], %s202
          %s205 = ssub.s32 16, 16
          %206 = vsyncadd %s201, %s205
          %s207 = smul.addr %s20, 16
          %s208 = scalar_lea.hbm %s2, %s207
          %s210 = sshll.u32 %s203, 4
          %s211 = int_to_ptr.vmem [resolvable:$true] %s210
          %213 = dma.hbm_to_vmem [thread:$0]  %s208, 16, %s211, %s201
        $region28: #{tpu_custom_call.1} parent=19 // pred_fallthru
          _
        // Predicated region
        $region29: #{tpu_custom_call.1} parent=19 // pred_check
          %p214 = pneg %p113
        $region30: #{tpu_custom_call.1} parent=19 // pred_check_branch
          %216 = sbr.rel (%p214) target = $region32
        $region31: #{tpu_custom_call.1} parent=19 // pred_region
          %s217 = sand.u32 %s103, 1
          %s218 = scalar_lea.sflag [#allocation9], %s217
          %s219 = sand.u32 %s103, 1
          %s220 = scalar_lea.vmem [#allocation8], %s219
          %s222 = ssub.s32 16, 16
          %223 = vsyncadd %s218, %s222
          %s224 = smul.addr %s20, 16
          %s225 = scalar_lea.hbm %s3, %s224
          %s227 = sshll.u32 %s220, 4
          %s228 = int_to_ptr.vmem [resolvable:$true] %s227
          %230 = dma.hbm_to_vmem [thread:$0]  %s225, 16, %s228, %s218
        $region32: #{tpu_custom_call.1} parent=19 // pred_fallthru
          _
      $region20: #{tpu_custom_call.1} parent=5 // pred_fallthru
        _
      %p231 = scmp.le.s32.totalorder 1, %s20
      %p232 = scmp.lt.s32.totalorder %s20, 4
      %p233 = pnand %p231, %p232
      %p234 = pneg %p233
      // Predicated region
      $region33: #{tpu_custom_call.1} parent=5 // pred_check
        _
      $region34: #{tpu_custom_call.1} parent=5 // pred_check_branch
        %236 = sbr.rel (%p233) target = $region36
      $region35: #{tpu_custom_call.1} parent=5 // pred_region
        %s237 = ssub.s32 %s20, 1
        // Predicated region
        $region37: #{tpu_custom_call.1} parent=35 // pred_check
          %p238 = pneg %p41
        $region38: #{tpu_custom_call.1} parent=35 // pred_check_branch
          %240 = sbr.rel (%p238) target = $region40
        $region39: #{tpu_custom_call.1} parent=35 // pred_region
          %241 = dma.done [#allocation3], 4608
        $region40: #{tpu_custom_call.1} parent=35 // pred_fallthru
          _
        %s242 = sand.u32 %s25, 1
        %s243 = scalar_lea.sflag [#allocation6], %s242
        %s244 = sand.u32 %s54, 1
        %s245 = smul.addr %s244, 1152
        %s246 = scalar_lea.vmem [#allocation5], %s245
        // Predicated region
        $region41: #{tpu_custom_call.1} parent=35 // pred_check
          %p247 = pneg %p67
        $region42: #{tpu_custom_call.1} parent=35 // pred_check_branch
          %249 = sbr.rel (%p247) target = $region44
        $region43: #{tpu_custom_call.1} parent=35 // pred_region
          %250 = dma.done %s243, 18432
        $region44: #{tpu_custom_call.1} parent=35 // pred_fallthru
          _
        %s251 = sand.u32 %s25, 1
        %s252 = scalar_lea.sflag [#allocation6], %s251
        %s253 = sand.u32 %s80, 1
        %s254 = scalar_lea.vmem [#allocation7], %s253
        // Predicated region
        $region45: #{tpu_custom_call.1} parent=35 // pred_check
          %p255 = pneg %p93
        $region46: #{tpu_custom_call.1} parent=35 // pred_check_branch
          %257 = sbr.rel (%p255) target = $region48
        $region47: #{tpu_custom_call.1} parent=35 // pred_region
          %258 = dma.done %s252, 16
        $region48: #{tpu_custom_call.1} parent=35 // pred_fallthru
          _
        %s259 = sand.u32 %s106, 1
        %s260 = scalar_lea.sflag [#allocation9], %s259
        %s261 = sand.u32 %s106, 1
        %s262 = scalar_lea.vmem [#allocation8], %s261
        // Predicated region
        $region49: #{tpu_custom_call.1} parent=35 // pred_check
          %p263 = pneg %p119
        $region50: #{tpu_custom_call.1} parent=35 // pred_check_branch
          %265 = sbr.rel (%p263) target = $region52
        $region51: #{tpu_custom_call.1} parent=35 // pred_region
          %266 = dma.done %s260, 16
        $region52: #{tpu_custom_call.1} parent=35 // pred_fallthru
          _
        %p267 = pneg %p41
        %p268 = pneg %p38
        %s269 = sand.u32 %s25, 1
        %s270 = scalar_lea.sflag [#allocation6], %s269
        %s271 = sand.u32 %s54, 1
        %s272 = smul.addr %s271, 1152
        %s273 = scalar_lea.vmem [#allocation5], %s272
        %p274 = pneg %p67
        %p275 = pneg %p64
        %s276 = sand.u32 %s25, 1
        %s277 = scalar_lea.sflag [#allocation6], %s276
        %s278 = sand.u32 %s80, 1
        %s279 = scalar_lea.vmem [#allocation7], %s278
        %p280 = pneg %p93
        %p281 = pneg %p90
        %s282 = sand.u32 %s106, 1
        %s283 = scalar_lea.sflag [#allocation9], %s282
        %s284 = sand.u32 %s106, 1
        %s285 = scalar_lea.vmem [#allocation8], %s284
        %p286 = pneg %p119
        %p287 = pneg %p116
        %p288 = pneg %p145
        %p289 = pneg %p142
        %s290 = sand.u32 %s132, 1
        %s291 = scalar_lea.sflag [#allocation4], %s290
        %s292 = sand.u32 %s132, 1
        %s293 = smul.addr %s292, 32
        %s294 = scalar_lea.vmem [#allocation10], %s293
        %v295 = vld [vmem:[#allocation2] sm:$0xff]
        %v296 = vld [vmem:[#allocation2 + $0x8] sm:$0xff]
        %v297 = vld [vmem:[#allocation2 + $0x10] sm:$0xff]
        %v298 = vld [vmem:[#allocation2 + $0x18] sm:$0xff]
        %v299 = vld [vmem:[#allocation2 + $0x20] sm:$0xff]
        %v300 = vld [vmem:[#allocation2 + $0x28] sm:$0xff]
        %v301 = vld [vmem:[#allocation2 + $0x30] sm:$0xff]
        %v302 = vld [vmem:[#allocation2 + $0x38] sm:$0xff]
        %v303 = vld [vmem:[#allocation2 + $0x40] sm:$0xff]
        %v304 = vld [vmem:[#allocation2 + $0x48] sm:$0xff]
        %v305 = vld [vmem:[#allocation2 + $0x50] sm:$0xff]
        %v306 = vld [vmem:[#allocation2 + $0x58] sm:$0xff]
        %v307 = vld [vmem:[#allocation2 + $0x60] sm:$0xff]
        %v308 = vld [vmem:[#allocation2 + $0x68] sm:$0xff]
        %v309 = vld [vmem:[#allocation2 + $0x70] sm:$0xff]
        %v310 = vld [vmem:[#allocation2 + $0x78] sm:$0xff]
        %v311 = vld [vmem:[#allocation2 + $0x80] sm:$0xff]
        %v312 = vld [vmem:[#allocation2 + $0x88] sm:$0xff]
        %v313 = vld [vmem:[#allocation2 + $0x90] sm:$0xff]
        %v314 = vld [vmem:[#allocation2 + $0x98] sm:$0xff]
        %v315 = vld [vmem:[#allocation2 + $0xa0] sm:$0xff]
        %v316 = vld [vmem:[#allocation2 + $0xa8] sm:$0xff]
        %v317 = vld [vmem:[#allocation2 + $0xb0] sm:$0xff]
        %v318 = vld [vmem:[#allocation2 + $0xb8] sm:$0xff]
        %v319 = vld [vmem:[#allocation2 + $0xc0] sm:$0xff]
        %v320 = vld [vmem:[#allocation2 + $0xc8] sm:$0xff]
        %v321 = vld [vmem:[#allocation2 + $0xd0] sm:$0xff]
        %v322 = vld [vmem:[#allocation2 + $0xd8] sm:$0x1]
        %v323 = vld [vmem:[#allocation2 + $0xe0] sm:$0x1]
        %v324 = vld [vmem:[#allocation2 + $0xe8] sm:$0x1]
        %v325 = vld [vmem:[#allocation2 + $0xf0] sm:$0x1]
        %v326 = vld [vmem:[#allocation2 + $0xf8] sm:$0x1]
        %v327 = vld [vmem:[#allocation2 + $0x100] sm:$0x1]
        %v328 = vld [vmem:[#allocation2 + $0x108] sm:$0x1]
        %v329 = vld [vmem:[#allocation2 + $0x110] sm:$0x1]
        %v330 = vld [vmem:[#allocation2 + $0x118] sm:$0x1]
        %v331 = vld [vmem:[%s246] sm:$0xff]
        %v332 = vld [vmem:[%s246 + $0x8] sm:$0xff]
        %v333 = vld [vmem:[%s246 + $0x10] sm:$0xff]
        %v334 = vld [vmem:[%s246 + $0x18] sm:$0xff]
        %v335 = vld [vmem:[%s246 + $0x20] sm:$0xff]
        %v336 = vld [vmem:[%s246 + $0x28] sm:$0xff]
        %v337 = vld [vmem:[%s246 + $0x30] sm:$0xff]
        %v338 = vld [vmem:[%s246 + $0x38] sm:$0xff]
        %v339 = vld [vmem:[%s246 + $0x40] sm:$0xff]
        %v340 = vld [vmem:[%s246 + $0x48] sm:$0xff]
        %v341 = vld [vmem:[%s246 + $0x50] sm:$0xff]
        %v342 = vld [vmem:[%s246 + $0x58] sm:$0xff]
        %v343 = vld [vmem:[%s246 + $0x60] sm:$0xff]
        %v344 = vld [vmem:[%s246 + $0x68] sm:$0xff]
        %v345 = vld [vmem:[%s246 + $0x70] sm:$0xff]
        %v346 = vld [vmem:[%s246 + $0x78] sm:$0xff]
        %v347 = vld [vmem:[%s246 + $0x80] sm:$0xff]
        %v348 = vld [vmem:[%s246 + $0x88] sm:$0xff]
        %v349 = vld [vmem:[%s246 + $0x90] sm:$0xff]
        %v350 = vld [vmem:[%s246 + $0x98] sm:$0xff]
        %v351 = vld [vmem:[%s246 + $0xa0] sm:$0xff]
        %v352 = vld [vmem:[%s246 + $0xa8] sm:$0xff]
        %v353 = vld [vmem:[%s246 + $0xb0] sm:$0xff]
        %v354 = vld [vmem:[%s246 + $0xb8] sm:$0xff]
        %v355 = vld [vmem:[%s246 + $0xc0] sm:$0xff]
        %v356 = vld [vmem:[%s246 + $0xc8] sm:$0xff]
        %v357 = vld [vmem:[%s246 + $0xd0] sm:$0xff]
        %v358 = vld [vmem:[%s246 + $0xd8] sm:$0xff]
        %v359 = vld [vmem:[%s246 + $0xe0] sm:$0xff]
        %v360 = vld [vmem:[%s246 + $0xe8] sm:$0xff]
        %v361 = vld [vmem:[%s246 + $0xf0] sm:$0xff]
        %v362 = vld [vmem:[%s246 + $0xf8] sm:$0xff]
        %v363 = vld [vmem:[%s246 + $0x100] sm:$0xff]
        %v364 = vld [vmem:[%s246 + $0x108] sm:$0xff]
        %v365 = vld [vmem:[%s246 + $0x110] sm:$0xff]
        %v366 = vld [vmem:[%s246 + $0x118] sm:$0xff]
        %v367 = vld [vmem:[%s246 + $0x120] sm:$0xff]
        %v368 = vld [vmem:[%s246 + $0x128] sm:$0xff]
        %v369 = vld [vmem:[%s246 + $0x130] sm:$0xff]
        %v370 = vld [vmem:[%s246 + $0x138] sm:$0xff]
        %v371 = vld [vmem:[%s246 + $0x140] sm:$0xff]
        %v372 = vld [vmem:[%s246 + $0x148] sm:$0xff]
        %v373 = vld [vmem:[%s246 + $0x150] sm:$0xff]
        %v374 = vld [vmem:[%s246 + $0x158] sm:$0xff]
        %v375 = vld [vmem:[%s246 + $0x160] sm:$0xff]
        %v376 = vld [vmem:[%s246 + $0x168] sm:$0xff]
        %v377 = vld [vmem:[%s246 + $0x170] sm:$0xff]
        %v378 = vld [vmem:[%s246 + $0x178] sm:$0xff]
        %v379 = vld [vmem:[%s246 + $0x180] sm:$0xff]
        %v380 = vld [vmem:[%s246 + $0x188] sm:$0xff]
        %v381 = vld [vmem:[%s246 + $0x190] sm:$0xff]
        %v382 = vld [vmem:[%s246 + $0x198] sm:$0xff]
        %v383 = vld [vmem:[%s246 + $0x1a0] sm:$0xff]
        %v384 = vld [vmem:[%s246 + $0x1a8] sm:$0xff]
        %v385 = vld [vmem:[%s246 + $0x1b0] sm:$0xff]
        %v386 = vld [vmem:[%s246 + $0x1b8] sm:$0xff]
        %v387 = vld [vmem:[%s246 + $0x1c0] sm:$0xff]
        %v388 = vld [vmem:[%s246 + $0x1c8] sm:$0xff]
        %v389 = vld [vmem:[%s246 + $0x1d0] sm:$0xff]
        %v390 = vld [vmem:[%s246 + $0x1d8] sm:$0xff]
        %v391 = vld [vmem:[%s246 + $0x1e0] sm:$0xff]
        %v392 = vld [vmem:[%s246 + $0x1e8] sm:$0xff]
        %v393 = vld [vmem:[%s246 + $0x1f0] sm:$0xff]
        %v394 = vld [vmem:[%s246 + $0x1f8] sm:$0xff]
        %v395 = vld [vmem:[%s246 + $0x200] sm:$0xff]
        %v396 = vld [vmem:[%s246 + $0x208] sm:$0xff]
        %v397 = vld [vmem:[%s246 + $0x210] sm:$0xff]
        %v398 = vld [vmem:[%s246 + $0x218] sm:$0xff]
        %v399 = vld [vmem:[%s246 + $0x220] sm:$0xff]
        %v400 = vld [vmem:[%s246 + $0x228] sm:$0xff]
        %v401 = vld [vmem:[%s246 + $0x230] sm:$0xff]
        %v402 = vld [vmem:[%s246 + $0x238] sm:$0xff]
        %v403 = vld [vmem:[%s246 + $0x240] sm:$0xff]
        %v404 = vld [vmem:[%s246 + $0x248] sm:$0xff]
        %v405 = vld [vmem:[%s246 + $0x250] sm:$0xff]
        %v406 = vld [vmem:[%s246 + $0x258] sm:$0xff]
        %v407 = vld [vmem:[%s246 + $0x260] sm:$0xff]
        %v408 = vld [vmem:[%s246 + $0x268] sm:$0xff]
        %v409 = vld [vmem:[%s246 + $0x270] sm:$0xff]
        %v410 = vld [vmem:[%s246 + $0x278] sm:$0xff]
        %v411 = vld [vmem:[%s246 + $0x280] sm:$0xff]
        %v412 = vld [vmem:[%s246 + $0x288] sm:$0xff]
        %v413 = vld [vmem:[%s246 + $0x290] sm:$0xff]
        %v414 = vld [vmem:[%s246 + $0x298] sm:$0xff]
        %v415 = vld [vmem:[%s246 + $0x2a0] sm:$0xff]
        %v416 = vld [vmem:[%s246 + $0x2a8] sm:$0xff]
        %v417 = vld [vmem:[%s246 + $0x2b0] sm:$0xff]
        %v418 = vld [vmem:[%s246 + $0x2b8] sm:$0xff]
        %v419 = vld [vmem:[%s246 + $0x2c0] sm:$0xff]
        %v420 = vld [vmem:[%s246 + $0x2c8] sm:$0xff]
        %v421 = vld [vmem:[%s246 + $0x2d0] sm:$0xff]
        %v422 = vld [vmem:[%s246 + $0x2d8] sm:$0xff]
        %v423 = vld [vmem:[%s246 + $0x2e0] sm:$0xff]
        %v424 = vld [vmem:[%s246 + $0x2e8] sm:$0xff]
        %v425 = vld [vmem:[%s246 + $0x2f0] sm:$0xff]
        %v426 = vld [vmem:[%s246 + $0x2f8] sm:$0xff]
        %v427 = vld [vmem:[%s246 + $0x300] sm:$0xff]
        %v428 = vld [vmem:[%s246 + $0x308] sm:$0xff]
        %v429 = vld [vmem:[%s246 + $0x310] sm:$0xff]
        %v430 = vld [vmem:[%s246 + $0x318] sm:$0xff]
        %v431 = vld [vmem:[%s246 + $0x320] sm:$0xff]
        %v432 = vld [vmem:[%s246 + $0x328] sm:$0xff]
        %v433 = vld [vmem:[%s246 + $0x330] sm:$0xff]
        %v434 = vld [vmem:[%s246 + $0x338] sm:$0xff]
        %v435 = vld [vmem:[%s246 + $0x340] sm:$0xff]
        %v436 = vld [vmem:[%s246 + $0x348] sm:$0xff]
        %v437 = vld [vmem:[%s246 + $0x350] sm:$0xff]
        %v438 = vld [vmem:[%s246 + $0x358] sm:$0xff]
        %v439 = vld [vmem:[%s246 + $0x360] sm:$0xff]
        %v440 = vld [vmem:[%s246 + $0x368] sm:$0xff]
        %v441 = vld [vmem:[%s246 + $0x370] sm:$0xff]
        %v442 = vld [vmem:[%s246 + $0x378] sm:$0xff]
        %v443 = vld [vmem:[%s246 + $0x380] sm:$0xff]
        %v444 = vld [vmem:[%s246 + $0x388] sm:$0xff]
        %v445 = vld [vmem:[%s246 + $0x390] sm:$0xff]
        %v446 = vld [vmem:[%s246 + $0x398] sm:$0xff]
        %v447 = vld [vmem:[%s246 + $0x3a0] sm:$0xff]
        %v448 = vld [vmem:[%s246 + $0x3a8] sm:$0xff]
        %v449 = vld [vmem:[%s246 + $0x3b0] sm:$0xff]
        %v450 = vld [vmem:[%s246 + $0x3b8] sm:$0xff]
        %v451 = vld [vmem:[%s246 + $0x3c0] sm:$0xff]
        %v452 = vld [vmem:[%s246 + $0x3c8] sm:$0xff]
        %v453 = vld [vmem:[%s246 + $0x3d0] sm:$0xff]
        %v454 = vld [vmem:[%s246 + $0x3d8] sm:$0xff]
        %v455 = vld [vmem:[%s246 + $0x3e0] sm:$0xff]
        %v456 = vld [vmem:[%s246 + $0x3e8] sm:$0xff]
        %v457 = vld [vmem:[%s246 + $0x3f0] sm:$0xff]
        %v458 = vld [vmem:[%s246 + $0x3f8] sm:$0xff]
        %v459 = vld [vmem:[%s246 + $0x400] sm:$0xff]
        %v460 = vld [vmem:[%s246 + $0x408] sm:$0xff]
        %v461 = vld [vmem:[%s246 + $0x410] sm:$0xff]
        %v462 = vld [vmem:[%s246 + $0x418] sm:$0xff]
        %v463 = vld [vmem:[%s246 + $0x420] sm:$0xff]
        %v464 = vld [vmem:[%s246 + $0x428] sm:$0xff]
        %v465 = vld [vmem:[%s246 + $0x430] sm:$0xff]
        %v466 = vld [vmem:[%s246 + $0x438] sm:$0xff]
        %v467 = vld [vmem:[%s246 + $0x440] sm:$0xff]
        %v468 = vld [vmem:[%s246 + $0x448] sm:$0xff]
        %v469 = vld [vmem:[%s246 + $0x450] sm:$0xff]
        %v470 = vld [vmem:[%s246 + $0x458] sm:$0xff]
        %v471 = vld [vmem:[%s246 + $0x460] sm:$0xff]
        %v472 = vld [vmem:[%s246 + $0x468] sm:$0xff]
        %v473 = vld [vmem:[%s246 + $0x470] sm:$0xff]
        %v474 = vld [vmem:[%s246 + $0x478] sm:$0xff]
        %475 = vmatprep.subr.mxu0 0.0
        %476 = vmatpush1.msra.mxu0 %v331
        %477 = vmatprep.subr.mxu0 0.0
        %478 = vmatpush1.msra.mxu0 %v332
        %479 = vmatprep.subr.mxu0 0.0
        %480 = vmatpush1.msra.mxu0 %v333
        %481 = vmatprep.subr.mxu0 0.0
        %482 = vmatpush1.msra.mxu0 %v334
        %483 = vmatprep.subr.mxu0 0.0
        %484 = vmatpush1.msra.mxu0 %v335
        %485 = vmatprep.subr.mxu0 0.0
        %486 = vmatpush1.msra.mxu0 %v336
        %487 = vmatprep.subr.mxu0 0.0
        %488 = vmatpush1.msra.mxu0 %v337
        %489 = vmatprep.subr.mxu0 0.0
        %490 = vmatpush1.msra.mxu0 %v338
        %491 = vmatprep.subr.mxu0 0.0
        %492 = vmatpush1.msra.mxu0 %v339
        %493 = vmatprep.subr.mxu0 0.0
        %494 = vmatpush1.msra.mxu0 %v340
        %495 = vmatprep.subr.mxu0 0.0
        %496 = vmatpush1.msra.mxu0 %v341
        %497 = vmatprep.subr.mxu0 0.0
        %498 = vmatpush1.msra.mxu0 %v342
        %499 = vmatprep.subr.mxu0 0.0
        %500 = vmatpush1.msra.mxu0 %v343
        %501 = vmatprep.subr.mxu0 0.0
        %502 = vmatpush1.msra.mxu0 %v344
        %503 = vmatprep.subr.mxu0 0.0
        %504 = vmatpush1.msra.mxu0 %v345
        %505 = vmatprep.subr.mxu0 0.0
        %506 = vmatpush1.msra.mxu0 %v346
        %507 = vmatprep.subr.mxu0 0.0
        %508 = vmatpush1.msra.mxu0 %v347
        %509 = vmatprep.subr.mxu0 0.0
        %510 = vmatpush1.msra.mxu0 %v348
        %511 = vmatprep.subr.mxu0 0.0
        %512 = vmatpush1.msra.mxu0 %v349
        %513 = vmatprep.subr.mxu0 0.0
        %514 = vmatpush1.msra.mxu0 %v350
        %515 = vmatprep.subr.mxu0 0.0
        %516 = vmatpush1.msra.mxu0 %v351
        %517 = vmatprep.subr.mxu0 0.0
        %518 = vmatpush1.msra.mxu0 %v352
        %519 = vmatprep.subr.mxu0 0.0
        %520 = vmatpush1.msra.mxu0 %v353
        %521 = vmatprep.subr.mxu0 0.0
        %522 = vmatpush1.msra.mxu0 %v354
        %523 = vmatprep.subr.mxu0 0.0
        %524 = vmatpush1.msra.mxu0 %v355
        %525 = vmatprep.subr.mxu0 0.0
        %526 = vmatpush1.msra.mxu0 %v356
        %527 = vmatprep.subr.mxu0 0.0
        %528 = vmatpush1.msra.mxu0 %v357
        %529 = vmatprep.subr.mxu0 0.0
        %530 = vmatpush1.msra.mxu0 %v358
        %531 = vmatprep.subr.mxu0 0.0
        %532 = vmatpush1.msra.mxu0 %v359
        %533 = vmatprep.subr.mxu0 0.0
        %534 = vmatpush1.msra.mxu0 %v360
        %535 = vmatprep.subr.mxu0 0.0
        %536 = vmatpush1.msra.mxu0 %v361
        %537 = vmatprep.subr.mxu0 0.0
        %538 = vmatpush1.msra.mxu0 %v362
        %539 = vmatprep.mubr.f32.mxu0 %v296
        %540 = vmatmul.mubr.f32.gmra.mrb[0].mxu0 %v295
        %v541 = vpop.f32.mrb[0].mxu0
        %v542 = vadd.f32 0.0, %v541
        %v543 = vpop.f32.mrb[0].mxu0
        %544 = vmatprep.mubr.f32.mxu0 %v305
        %545 = vmatmul.mubr.f32.gmra.mrb[0].mxu0 %v304
        %v546 = vpop.f32.mrb[0].mxu0
        %v547 = vadd.f32 0.0, %v546
        %v548 = vpop.f32.mrb[0].mxu0
        %549 = vmatprep.mubr.f32.mxu0 %v314
        %550 = vmatmul.mubr.f32.gmra.mrb[0].mxu0 %v313
        %v551 = vpop.f32.mrb[0].mxu0
        %v552 = vadd.f32 0.0, %v551
        %v553 = vpop.f32.mrb[0].mxu0
        %554 = vmatprep.mubr.f32.mxu0 %v323
        %555 = vmatmul.mubr.f32.gmra.mrb[0].mxu0 %v322
        %v556 = vpop.f32.mrb[0].mxu0
        %v557 = vadd.f32 0.0, %v556
        %v558 = vpop.f32.mrb[0].mxu0
        %559 = vdwg.mxu0
        %560 = vmatprep.subr.mxu0 0.0
        %561 = vmatpush1.msra.mxu0 %v363
        %562 = vmatprep.subr.mxu0 0.0
        %563 = vmatpush1.msra.mxu0 %v364
        %564 = vmatprep.subr.mxu0 0.0
        %565 = vmatpush1.msra.mxu0 %v365
        %566 = vmatprep.subr.mxu0 0.0
        %567 = vmatpush1.msra.mxu0 %v366
        %568 = vmatprep.subr.mxu0 0.0
        %569 = vmatpush1.msra.mxu0 %v367
        %570 = vmatprep.subr.mxu0 0.0
        %571 = vmatpush1.msra.mxu0 %v368
        %572 = vmatprep.subr.mxu0 0.0
        %573 = vmatpush1.msra.mxu0 %v369
        %574 = vmatprep.subr.mxu0 0.0
        %575 = vmatpush1.msra.mxu0 %v370
        %576 = vmatprep.subr.mxu0 0.0
        %577 = vmatpush1.msra.mxu0 %v371
        %578 = vmatprep.subr.mxu0 0.0
        %579 = vmatpush1.msra.mxu0 %v372
        %580 = vmatprep.subr.mxu0 0.0
        %581 = vmatpush1.msra.mxu0 %v373
        %582 = vmatprep.subr.mxu0 0.0
        %583 = vmatpush1.msra.mxu0 %v374
        %584 = vmatprep.subr.mxu0 0.0
        %585 = vmatpush1.msra.mxu0 %v375
        %586 = vmatprep.subr.mxu0 0.0
        %587 = vmatpush1.msra.mxu0 %v376
        %588 = vmatprep.subr.mxu0 0.0
        %589 = vmatpush1.msra.mxu0 %v377
        %590 = vmatprep.subr.mxu0 0.0
        %591 = vmatpush1.msra.mxu0 %v378
        %592 = vmatprep.subr.mxu0 0.0
        %593 = vmatpush1.msra.mxu0 %v379
        %594 = vmatprep.subr.mxu0 0.0
        %595 = vmatpush1.msra.mxu0 %v380
        %596 = vmatprep.subr.mxu0 0.0
        %597 = vmatpush1.msra.mxu0 %v381
        %598 = vmatprep.subr.mxu0 0.0
        %599 = vmatpush1.msra.mxu0 %v382
        %600 = vmatprep.subr.mxu0 0.0
        %601 = vmatpush1.msra.mxu0 %v383
        %602 = vmatprep.subr.mxu0 0.0
        %603 = vmatpush1.msra.mxu0 %v384
        %604 = vmatprep.subr.mxu0 0.0
        %605 = vmatpush1.msra.mxu0 %v385
        %606 = vmatprep.subr.mxu0 0.0
        %607 = vmatpush1.msra.mxu0 %v386
        %608 = vmatprep.subr.mxu0 0.0
        %609 = vmatpush1.msra.mxu0 %v387
        %610 = vmatprep.subr.mxu0 0.0
        %611 = vmatpush1.msra.mxu0 %v388
        %612 = vmatprep.subr.mxu0 0.0
        %613 = vmatpush1.msra.mxu0 %v389
        %614 = vmatprep.subr.mxu0 0.0
        %615 = vmatpush1.msra.mxu0 %v390
        %616 = vmatprep.subr.mxu0 0.0
        %617 = vmatpush1.msra.mxu0 %v391
        %618 = vmatprep.subr.mxu0 0.0
        %619 = vmatpush1.msra.mxu0 %v392
        %620 = vmatprep.subr.mxu0 0.0
        %621 = vmatpush1.msra.mxu0 %v393
        %622 = vmatprep.subr.mxu0 0.0
        %623 = vmatpush1.msra.mxu0 %v394
        %624 = vmatprep.mubr.f32.mxu0 %v298
        %625 = vmatmul.mubr.f32.gmra.mrb[0].mxu0 %v297
        %v626 = vpop.f32.mrb[0].mxu0
        %v627 = vadd.f32 %v542, %v626
        %v628 = vpop.f32.mrb[0].mxu0
        %629 = vmatprep.mubr.f32.mxu0 %v307
        %630 = vmatmul.mubr.f32.gmra.mrb[0].mxu0 %v306
        %v631 = vpop.f32.mrb[0].mxu0
        %v632 = vadd.f32 %v547, %v631
        %v633 = vpop.f32.mrb[0].mxu0
        %634 = vmatprep.mubr.f32.mxu0 %v316
        %635 = vmatmul.mubr.f32.gmra.mrb[0].mxu0 %v315
        %v636 = vpop.f32.mrb[0].mxu0
        %v637 = vadd.f32 %v552, %v636
        %v638 = vpop.f32.mrb[0].mxu0
        %639 = vmatprep.mubr.f32.mxu0 %v325
        %640 = vmatmul.mubr.f32.gmra.mrb[0].mxu0 %v324
        %v641 = vpop.f32.mrb[0].mxu0
        %v642 = vadd.f32 %v557, %v641
        %v643 = vpop.f32.mrb[0].mxu0
        %644 = vdwg.mxu0
        %645 = vmatprep.subr.mxu0 0.0
        %646 = vmatpush1.msra.mxu0 %v395
        %647 = vmatprep.subr.mxu0 0.0
        %648 = vmatpush1.msra.mxu0 %v396
        %649 = vmatprep.subr.mxu0 0.0
        %650 = vmatpush1.msra.mxu0 %v397
        %651 = vmatprep.subr.mxu0 0.0
        %652 = vmatpush1.msra.mxu0 %v398
        %653 = vmatprep.subr.mxu0 0.0
        %654 = vmatpush1.msra.mxu0 %v399
        %655 = vmatprep.subr.mxu0 0.0
        %656 = vmatpush1.msra.mxu0 %v400
        %657 = vmatprep.subr.mxu0 0.0
        %658 = vmatpush1.msra.mxu0 %v401
        %659 = vmatprep.subr.mxu0 0.0
        %660 = vmatpush1.msra.mxu0 %v402
        %661 = vmatprep.subr.mxu0 0.0
        %662 = vmatpush1.msra.mxu0 %v403
        %663 = vmatprep.subr.mxu0 0.0
        %664 = vmatpush1.msra.mxu0 %v404
        %665 = vmatprep.subr.mxu0 0.0
        %666 = vmatpush1.msra.mxu0 %v405
        %667 = vmatprep.subr.mxu0 0.0
        %668 = vmatpush1.msra.mxu0 %v406
        %669 = vmatprep.subr.mxu0 0.0
        %670 = vmatpush1.msra.mxu0 %v407
        %671 = vmatprep.subr.mxu0 0.0
        %672 = vmatpush1.msra.mxu0 %v408
        %673 = vmatprep.subr.mxu0 0.0
        %674 = vmatpush1.msra.mxu0 %v409
        %675 = vmatprep.subr.mxu0 0.0
        %676 = vmatpush1.msra.mxu0 %v410
        %677 = vmatprep.subr.mxu0 0.0
        %678 = vmatpush1.msra.mxu0 %v411
        %679 = vmatprep.subr.mxu0 0.0
        %680 = vmatpush1.msra.mxu0 %v412
        %681 = vmatprep.subr.mxu0 0.0
        %682 = vmatpush1.msra.mxu0 %v413
        %683 = vmatprep.subr.mxu0 0.0
        %684 = vmatpush1.msra.mxu0 %v414
        %685 = vmatprep.subr.mxu0 0.0
        %686 = vmatpush1.msra.mxu0 %v415
        %687 = vmatprep.subr.mxu0 0.0
        %688 = vmatpush1.msra.mxu0 %v416
        %689 = vmatprep.subr.mxu0 0.0
        %690 = vmatpush1.msra.mxu0 %v417
        %691 = vmatprep.subr.mxu0 0.0
        %692 = vmatpush1.msra.mxu0 %v418
        %693 = vmatprep.subr.mxu0 0.0
        %694 = vmatpush1.msra.mxu0 %v419
        %695 = vmatprep.subr.mxu0 0.0
        %696 = vmatpush1.msra.mxu0 %v420
        %697 = vmatprep.subr.mxu0 0.0
        %698 = vmatpush1.msra.mxu0 %v421
        %699 = vmatprep.subr.mxu0 0.0
        %700 = vmatpush1.msra.mxu0 %v422
        %701 = vmatprep.subr.mxu0 0.0
        %702 = vmatpush1.msra.mxu0 %v423
        %703 = vmatprep.subr.mxu0 0.0
        %704 = vmatpush1.msra.mxu0 %v424
        %705 = vmatprep.subr.mxu0 0.0
        %706 = vmatpush1.msra.mxu0 %v425
        %707 = vmatprep.subr.mxu0 0.0
        %708 = vmatpush1.msra.mxu0 %v426
        %709 = vmatprep.mubr.f32.mxu0 %v300
        %710 = vmatmul.mubr.f32.gmra.mrb[0].mxu0 %v299
        %v711 = vpop.f32.mrb[0].mxu0
        %v712 = vadd.f32 %v627, %v711
        %v713 = vpop.f32.mrb[0].mxu0
        %714 = vmatprep.mubr.f32.mxu0 %v309
        %715 = vmatmul.mubr.f32.gmra.mrb[0].mxu0 %v308
        %v716 = vpop.f32.mrb[0].mxu0
        %v717 = vadd.f32 %v632, %v716
        %v718 = vpop.f32.mrb[0].mxu0
        %719 = vmatprep.mubr.f32.mxu0 %v318
        %720 = vmatmul.mubr.f32.gmra.mrb[0].mxu0 %v317
        %v721 = vpop.f32.mrb[0].mxu0
        %v722 = vadd.f32 %v637, %v721
        %v723 = vpop.f32.mrb[0].mxu0
        %724 = vmatprep.mubr.f32.mxu0 %v327
        %725 = vmatmul.mubr.f32.gmra.mrb[0].mxu0 %v326
        %v726 = vpop.f32.mrb[0].mxu0
        %v727 = vadd.f32 %v642, %v726
        %v728 = vpop.f32.mrb[0].mxu0
        %729 = vdwg.mxu0
        %730 = vmatprep.subr.mxu0 0.0
        %731 = vmatpush1.msra.mxu0 %v427
        %732 = vmatprep.subr.mxu0 0.0
        %733 = vmatpush1.msra.mxu0 %v428
        %734 = vmatprep.subr.mxu0 0.0
        %735 = vmatpush1.msra.mxu0 %v429
        %736 = vmatprep.subr.mxu0 0.0
        %737 = vmatpush1.msra.mxu0 %v430
        %738 = vmatprep.subr.mxu0 0.0
        %739 = vmatpush1.msra.mxu0 %v431
        %740 = vmatprep.subr.mxu0 0.0
        %741 = vmatpush1.msra.mxu0 %v432
        %742 = vmatprep.subr.mxu0 0.0
        %743 = vmatpush1.msra.mxu0 %v433
        %744 = vmatprep.subr.mxu0 0.0
        %745 = vmatpush1.msra.mxu0 %v434
        %746 = vmatprep.subr.mxu0 0.0
        %747 = vmatpush1.msra.mxu0 %v435
        %748 = vmatprep.subr.mxu0 0.0
        %749 = vmatpush1.msra.mxu0 %v436
        %750 = vmatprep.subr.mxu0 0.0
        %751 = vmatpush1.msra.mxu0 %v437
        %752 = vmatprep.subr.mxu0 0.0
        %753 = vmatpush1.msra.mxu0 %v438
        %754 = vmatprep.subr.mxu0 0.0
        %755 = vmatpush1.msra.mxu0 %v439
        %756 = vmatprep.subr.mxu0 0.0
        %757 = vmatpush1.msra.mxu0 %v440
        %758 = vmatprep.subr.mxu0 0.0
        %759 = vmatpush1.msra.mxu0 %v441
        %760 = vmatprep.subr.mxu0 0.0
        %761 = vmatpush1.msra.mxu0 %v442
        %762 = vmatprep.subr.mxu0 0.0
        %763 = vmatpush1.msra.mxu0 %v443
        %764 = vmatprep.subr.mxu0 0.0
        %765 = vmatpush1.msra.mxu0 %v444
        %766 = vmatprep.subr.mxu0 0.0
        %767 = vmatpush1.msra.mxu0 %v445
        %768 = vmatprep.subr.mxu0 0.0
        %769 = vmatpush1.msra.mxu0 %v446
        %770 = vmatprep.subr.mxu0 0.0
        %771 = vmatpush1.msra.mxu0 %v447
        %772 = vmatprep.subr.mxu0 0.0
        %773 = vmatpush1.msra.mxu0 %v448
        %774 = vmatprep.subr.mxu0 0.0
        %775 = vmatpush1.msra.mxu0 %v449
        %776 = vmatprep.subr.mxu0 0.0
        %777 = vmatpush1.msra.mxu0 %v450
        %778 = vmatprep.subr.mxu0 0.0
        %779 = vmatpush1.msra.mxu0 %v451
        %780 = vmatprep.subr.mxu0 0.0
        %781 = vmatpush1.msra.mxu0 %v452
        %782 = vmatprep.subr.mxu0 0.0
        %783 = vmatpush1.msra.mxu0 %v453
        %784 = vmatprep.subr.mxu0 0.0
        %785 = vmatpush1.msra.mxu0 %v454
        %786 = vmatprep.subr.mxu0 0.0
        %787 = vmatpush1.msra.mxu0 %v455
        %788 = vmatprep.subr.mxu0 0.0
        %789 = vmatpush1.msra.mxu0 %v456
        %790 = vmatprep.subr.mxu0 0.0
        %791 = vmatpush1.msra.mxu0 %v457
        %792 = vmatprep.subr.mxu0 0.0
        %793 = vmatpush1.msra.mxu0 %v458
        %794 = vmatprep.mubr.f32.mxu0 %v302
        %795 = vmatmul.mubr.f32.gmra.mrb[0].mxu0 %v301
        %v796 = vpop.f32.mrb[0].mxu0
        %v797 = vadd.f32 %v712, %v796
        %v798 = vpop.f32.mrb[0].mxu0
        %799 = vmatprep.mubr.f32.mxu0 %v311
        %800 = vmatmul.mubr.f32.gmra.mrb[0].mxu0 %v310
        %v801 = vpop.f32.mrb[0].mxu0
        %v802 = vadd.f32 %v717, %v801
        %v803 = vpop.f32.mrb[0].mxu0
        %804 = vmatprep.mubr.f32.mxu0 %v320
        %805 = vmatmul.mubr.f32.gmra.mrb[0].mxu0 %v319
        %v806 = vpop.f32.mrb[0].mxu0
        %v807 = vadd.f32 %v722, %v806
        %v808 = vpop.f32.mrb[0].mxu0
        %809 = vmatprep.mubr.f32.mxu0 %v329
        %810 = vmatmul.mubr.f32.gmra.mrb[0].mxu0 %v328
        %v811 = vpop.f32.mrb[0].mxu0
        %v812 = vadd.f32 %v727, %v811
        %v813 = vpop.f32.mrb[0].mxu0
        %814 = vdwg.mxu0
        %815 = vmatprep.subr.mxu0 0.0
        %816 = vmatpush1.msra.mxu0 %v459
        %817 = vmatprep.subr.mxu0 0.0
        %818 = vmatpush1.msra.mxu0 %v460
        %819 = vmatprep.subr.mxu0 0.0
        %820 = vmatpush1.msra.mxu0 %v461
        %821 = vmatprep.subr.mxu0 0.0
        %822 = vmatpush1.msra.mxu0 %v462
        %823 = vmatprep.subr.mxu0 0.0
        %824 = vmatpush1.msra.mxu0 %v463
        %825 = vmatprep.subr.mxu0 0.0
        %826 = vmatpush1.msra.mxu0 %v464
        %827 = vmatprep.subr.mxu0 0.0
        %828 = vmatpush1.msra.mxu0 %v465
        %829 = vmatprep.subr.mxu0 0.0
        %830 = vmatpush1.msra.mxu0 %v466
        %831 = vmatprep.subr.mxu0 0.0
        %832 = vmatpush1.msra.mxu0 %v467
        %833 = vmatprep.subr.mxu0 0.0
        %834 = vmatpush1.msra.mxu0 %v468
        %835 = vmatprep.subr.mxu0 0.0
        %836 = vmatpush1.msra.mxu0 %v469
        %837 = vmatprep.subr.mxu0 0.0
        %838 = vmatpush1.msra.mxu0 %v470
        %839 = vmatprep.subr.mxu0 0.0
        %840 = vmatpush1.msra.mxu0 %v471
        %841 = vmatprep.subr.mxu0 0.0
        %842 = vmatpush1.msra.mxu0 %v472
        %843 = vmatprep.subr.mxu0 0.0
        %844 = vmatpush1.msra.mxu0 %v473
        %845 = vmatprep.subr.mxu0 0.0
        %846 = vmatpush1.msra.mxu0 %v474
        %847 = vmatprep.subr.mxu0 0.0
        %848 = vmatpush1.msra.mxu0 0.0
        %849 = vmatprep.subr.mxu0 0.0
        %850 = vmatpush1.msra.mxu0 0.0
        %851 = vmatprep.subr.mxu0 0.0
        %852 = vmatpush1.msra.mxu0 0.0
        %853 = vmatprep.subr.mxu0 0.0
        %854 = vmatpush1.msra.mxu0 0.0
        %855 = vmatprep.subr.mxu0 0.0
        %856 = vmatpush1.msra.mxu0 0.0
        %857 = vmatprep.subr.mxu0 0.0
        %858 = vmatpush1.msra.mxu0 0.0
        %859 = vmatprep.subr.mxu0 0.0
        %860 = vmatpush1.msra.mxu0 0.0
        %861 = vmatprep.subr.mxu0 0.0
        %862 = vmatpush1.msra.mxu0 0.0
        %863 = vmatprep.subr.mxu0 0.0
        %864 = vmatpush1.msra.mxu0 0.0
        %865 = vmatprep.subr.mxu0 0.0
        %866 = vmatpush1.msra.mxu0 0.0
        %867 = vmatprep.subr.mxu0 0.0
        %868 = vmatpush1.msra.mxu0 0.0
        %869 = vmatprep.subr.mxu0 0.0
        %870 = vmatpush1.msra.mxu0 0.0
        %871 = vmatprep.subr.mxu0 0.0
        %872 = vmatpush1.msra.mxu0 0.0
        %873 = vmatprep.subr.mxu0 0.0
        %874 = vmatpush1.msra.mxu0 0.0
        %875 = vmatprep.subr.mxu0 0.0
        %876 = vmatpush1.msra.mxu0 0.0
        %877 = vmatprep.subr.mxu0 0.0
        %878 = vmatpush1.msra.mxu0 0.0
        %879 = vmatprep.mubr.f32.mxu0 0.0
        %880 = vmatmul.mubr.f32.gmra.mrb[0].mxu0 %v303
        %v881 = vpop.f32.mrb[0].mxu0
        %v882 = vadd.f32 %v797, %v881
        %v883 = vpop.f32.mrb[0].mxu0
        %884 = vmatprep.mubr.f32.mxu0 0.0
        %885 = vmatmul.mubr.f32.gmra.mrb[0].mxu0 %v312
        %v886 = vpop.f32.mrb[0].mxu0
        %v887 = vadd.f32 %v802, %v886
        %v888 = vpop.f32.mrb[0].mxu0
        %889 = vmatprep.mubr.f32.mxu0 0.0
        %890 = vmatmul.mubr.f32.gmra.mrb[0].mxu0 %v321
        %v891 = vpop.f32.mrb[0].mxu0
        %v892 = vadd.f32 %v807, %v891
        %v893 = vpop.f32.mrb[0].mxu0
        %894 = vmatprep.mubr.f32.mxu0 0.0
        %895 = vmatmul.mubr.f32.gmra.mrb[0].mxu0 %v330
        %v896 = vpop.f32.mrb[0].mxu0
        %v897 = vadd.f32 %v812, %v896
        %v898 = vpop.f32.mrb[0].mxu0
        %899 = vdwg.mxu0
        %v900 = vadd.f32 %v882, %v887
        %v901 = vadd.f32 %v900, %v892
        %vm902 = vcmask 1040384
        %v903 = vsel %vm902, %v897, 0.0
        %v904 = vadd.f32 %v901, %v903
        %v905 = vrot.slane %v904, 4
        %v906 = vadd.f32 %v904, %v905
        %v907 = vrot.slane %v906, 2
        %v908 = vadd.f32 %v906, %v907
        %v909 = vrot.slane %v908, 1
        %v910 = vadd.f32 %v908, %v909
        %v911 = vmul.f32 %v882, %v882
        %v912 = vmul.f32 %v887, %v887
        %v913 = vmul.f32 %v892, %v892
        %v914 = vmul.f32 %v897, %v897
        %v915 = vadd.f32 %v911, %v912
        %v916 = vadd.f32 %v915, %v913
        %v917 = vsel %vm902, %v914, 0.0
        %v918 = vadd.f32 %v916, %v917
        %v919 = vrot.slane %v918, 4
        %v920 = vadd.f32 %v918, %v919
        %v921 = vrot.slane %v920, 2
        %v922 = vadd.f32 %v920, %v921
        %v923 = vrot.slane %v922, 1
        %v924 = vadd.f32 %v922, %v923
        %v925 = vmul.f32 %v910, 0.04
        %v926 = vmul.f32 %v924, 0.04
        %v927 = vmul.f32 %v925, %v925
        %v928 = vsub.f32 %v926, %v927
        %v929 = vadd.f32 %v928, 0.001
        %v930 = vrsqrt.pop %v929
        %v931 = vsub.f32 %v882, %v925
        %v932 = vsub.f32 %v887, %v925
        %v933 = vsub.f32 %v892, %v925
        %v934 = vsub.f32 %v897, %v925
        %v935 = vld [vmem:[%s254] sm:$0x1]
        %v936 = vmul.f32 %v930, %v935
        %v937 = vlaneseq
        %v938 = vshrl.u32 %v937, 7
        %v939 = vsub.s32 0, %v938
        %v940 = vrot.slane %v936, %v939
        %v941 = vmul.f32 %v931, %v940
        %v942 = vmul.f32 %v932, %v940
        %v943 = vmul.f32 %v933, %v940
        %v944 = vmul.f32 %v934, %v940
        %v945 = vld [vmem:[%s262] sm:$0x1]
        %v947 = vlaneseq
        %v948 = vshrl.u32 %v947, 7
        %v949 = vsub.s32 0, %v948
        %v950 = vrot.slane %v945, %v949
        %v952 = vadd.f32 %v941, %v950
        %v953 = vadd.f32 %v942, %v950
        %v954 = vadd.f32 %v943, %v950
        %v955 = vadd.f32 %v944, %v950
        %v956 = vmax.f32 %v952, 0.0
        %v957 = vmax.f32 %v953, 0.0
        %v958 = vmax.f32 %v954, 0.0
        %v959 = vmax.f32 %v955, 0.0
        %960 = vst [vmem:[%s294] sm:$0xff] %v956
        %961 = vst [vmem:[%s294 + $0x8] sm:$0xff] %v957
        %962 = vst [vmem:[%s294 + $0x10] sm:$0xff] %v958
        %963 = vst [vmem:[%s294 + $0x18] sm:$0x1] %v959
        %s964 = sand.u32 %s132, 1
        %s965 = scalar_lea.sflag [#allocation4], %s964
        %s966 = sand.u32 %s132, 1
        %s967 = smul.addr %s966, 32
        %s968 = scalar_lea.vmem [#allocation10], %s967
        // Predicated region
        $region53: #{tpu_custom_call.1} parent=35 // pred_check
          %p969 = pneg %p142
        $region54: #{tpu_custom_call.1} parent=35 // pred_check_branch
          %971 = sbr.rel (%p969) target = $region56
        $region55: #{tpu_custom_call.1} parent=35 // pred_region
          %s973 = ssub.s32 512, 512
          %974 = vsyncadd %s965, %s973
          %s975 = smul.addr %s25, 128
          %s976 = scalar_lea.hbm %s4, %s975
          %s977 = sshll.u32 %s968, 4
          %s978 = int_to_ptr.vmem [resolvable:$true] %s977
          %983 = dma.vmem_to_hbm [thread:$0]  %s978, 512, %s976, %s965, 128, 384, 8
        $region56: #{tpu_custom_call.1} parent=35 // pred_fallthru
          _
      $region36: #{tpu_custom_call.1} parent=5 // pred_fallthru
        _
      %p984 = scmp.le.s32.totalorder 2, %s20
      // Predicated region
      $region57: #{tpu_custom_call.1} parent=5 // pred_check
        %p985 = pneg %p984
      $region58: #{tpu_custom_call.1} parent=5 // pred_check_branch
        %987 = sbr.rel (%p985) target = $region60
      $region59: #{tpu_custom_call.1} parent=5 // pred_region
        %s988 = ssub.s32 %s20, 2
        // Predicated region
        $region61: #{tpu_custom_call.1} parent=59 // pred_check
          %p989 = pneg %p148
        $region62: #{tpu_custom_call.1} parent=59 // pred_check_branch
          %991 = sbr.rel (%p989) target = $region64
        $region63: #{tpu_custom_call.1} parent=59 // pred_region
          %s992 = sand.u32 %s133, 1
          %s993 = scalar_lea.sflag [#allocation4], %s992
          %s994 = sand.u32 %s133, 1
          %s995 = smul.addr %s994, 32
          %s996 = scalar_lea.vmem [#allocation10], %s995
          %997 = dma.done %s993, 512
        $region64: #{tpu_custom_call.1} parent=59 // pred_fallthru
          _
      $region60: #{tpu_custom_call.1} parent=5 // pred_fallthru
        _
    $region6: #{tpu_custom_call.1} parent=1 // loop_footer
      %s24 = sadd.s32 1, %s20
    $region7: #{tpu_custom_call.1} parent=1 // loop_footer_branch
      %19 = sbr.rel target = $region3
    $region8: #{tpu_custom_call.1} parent=1 // loop_exit
      _
    %998 = vsyncpa [#allocation3], 1
    %s999 = scalar_lea.sflag [#allocation3], 1
    %1000 = vsyncpa %s999, 1
    %1001 = vsyncpa [#allocation6], 1
    %s1002 = scalar_lea.sflag [#allocation6], 1
    %1003 = vsyncpa %s1002, 1
    %1004 = vsyncpa [#allocation9], 1
    %s1005 = scalar_lea.sflag [#allocation9], 1
    %1006 = vsyncpa %s1005, 1
    %1007 = vsyncpa [#allocation4], 1
    %s1008 = scalar_lea.sflag [#allocation4], 1
    %1009 = vsyncpa %s1008, 1

</llo_original>
